<compile_context>
chip_gen: v6e
topology: v6e:2x2x1
jax: 0.10.0
libtpu: 0.0.40
codegen_flags: <defaults>
</compile_context>

<pallas_src>
import jax
import jax.numpy as jnp
from jax.experimental import pallas as pl
from jax.experimental.pallas import tpu as pltpu


def mlp_kernel(x_ref, w1_ref, b1_ref, w2_ref, b2_ref, w3_ref, b3_ref, o_ref):
    # x_ref : (input_size, TILE_B)   -- batch on lanes (bf16 or f32)
    # w1_ref: (64, input_size)  b1_ref: (64, 1) f32
    # w2_ref: (32, 64)          b2_ref: (32, 1) f32
    # w3_ref: (32, 1) f32       b3_ref: (1, 1) f32 in SMEM
    # o_ref : (1, TILE_B) f32        -- lane-dense output row

    # fc1 + ReLU: MXU matmul with f32 accumulation; bias/ReLU epilogue in f32.
    h1 = jnp.dot(w1_ref[...], x_ref[...], preferred_element_type=jnp.float32)
    h1 = jnp.maximum(h1 + b1_ref[...], 0.0)                  # (64, TILE_B) f32
    # dropout1: identity (eval mode)

    # fc2 + ReLU: feed h1 back to the MXU in the weight dtype (bf16 by default,
    # f32 on the exact path); accumulate in f32.
    h2 = jnp.dot(w2_ref[...], h1.astype(w2_ref.dtype),
                 preferred_element_type=jnp.float32)
    h2 = jnp.maximum(h2 + b2_ref[...], 0.0)                   # (32, TILE_B) f32
    # dropout2: identity (eval mode)

    # fc3 (32 -> 1): VPU broadcast-multiply + XLU sublane reduce (no M=1 MXU op).
    out = jnp.sum(h2 * w3_ref[...], axis=0, keepdims=True)    # (1, TILE_B) f32
    out = out + b3_ref[0, 0]                                  # scalar bias from SMEM
    o_ref[...] = out.astype(o_ref.dtype)                      # lane-dense store


def _round_up(n, m):
    return ((n + m - 1) // m) * m


def _per_column_vmem_bytes(in_size, mxu_itemsize):
    # Per batch-column VMEM footprint of one grid step:
    #   x tile (double-buffered) + out tile (double-buffered, f32)
    #   + f32 h1 (64) / h2 (32) temporaries.
    return (2 * in_size * mxu_itemsize      # x, 2 pipeline buffers
            + 2 * 1 * 4                     # out, 2 pipeline buffers
            + 64 * 4 + 32 * 4)              # h1 + h2 f32 intermediates


def _pick_tile_b(B, in_size, mxu_itemsize, *,
                 max_tile_b=32768, vmem_budget_bytes=24 << 20):
    """Biggest lane tile (multiple of 128) fitting the VMEM budget.

    Scales inversely with input_size; caps at max_tile_b so a tile that fits
    v6e's 128 MiB never blows v7x's 64 MiB VMEM.
    """
    per_col = _per_column_vmem_bytes(in_size, mxu_itemsize)
    tile = max(128, (vmem_budget_bytes // per_col) // 128 * 128)
    tile = min(tile, max_tile_b, _round_up(B, 128))
    return int(tile)


def price_prediction_forward(x, params, *, tile_b=None, use_bf16_inputs=True,
                             x_transposed=False):
    """Forward pass of PricePredictionModel.

    x: (B, input_size) f32, or (input_size, B) if x_transposed=True
       (lets callers keep the batch-on-lanes layout upstream and skip the
       wrapper transpose entirely).
    params: torch layout (w1 (64,in), b1 (64,), w2 (32,64), b2 (32,), w3 (1,32), b3 (1,)).
    Returns (B, 1) f32.
    """
    w1, b1, w2, b2, w3, b3 = params
    if x_transposed:
        in_size, B = x.shape
    else:
        B, in_size = x.shape
    h1_dim, h2_dim = w1.shape[0], w2.shape[0]

    mxu_dtype = jnp.bfloat16 if use_bf16_inputs else jnp.float32
    itemsize = jnp.dtype(mxu_dtype).itemsize

    # Adaptive, VMEM-budget-aware batch tile (lane axis, multiple of 128).
    if tile_b is None:
        tile_b = _pick_tile_b(B, in_size, itemsize)
    tile_b = min(tile_b, _round_up(B, 128))
    assert tile_b % 128 == 0
    b_pad = _round_up(B, tile_b)
    n_tiles = b_pad // tile_b

    # Batch on lanes: (input_size, b_pad). Cast to the MXU dtype BEFORE the
    # transpose/pad so the materialized relayout copy is half-size in bf16.
    if x_transposed:
        x_t = x.astype(mxu_dtype)
    else:
        x_t = x.astype(mxu_dtype).T
    if b_pad != B:
        x_t = jnp.pad(x_t, ((0, 0), (0, b_pad - B)))

    w1m = w1.astype(mxu_dtype)
    w2m = w2.astype(mxu_dtype)
    b1c = b1.reshape(h1_dim, 1).astype(jnp.float32)
    b2c = b2.reshape(h2_dim, 1).astype(jnp.float32)
    w3c = w3.reshape(h2_dim, 1).astype(jnp.float32)
    b3s = b3.reshape(1, 1).astype(jnp.float32)

    # Explicit VMEM limit from the computed footprint (+ resident weights and
    # headroom), so bigger tiles don't trip the scoped default (v5e: 16 MiB)
    # while never exceeding v7x's 64 MiB physical budget.
    per_col = _per_column_vmem_bytes(in_size, itemsize)
    weight_bytes = ((w1.size + w2.size) * itemsize
                    + (b1.size + b2.size + w3.size + b3.size) * 4)
    vmem_limit = min(per_col * tile_b + weight_bytes + (8 << 20), 64 << 20)

    cost = pl.CostEstimate(
        flops=2 * b_pad * (in_size * h1_dim + h1_dim * h2_dim + h2_dim),
        transcendentals=0,
        bytes_accessed=(b_pad * in_size * itemsize            # x
                        + b_pad * 4                            # out
                        + (w1.size + w2.size) * itemsize
                        + (b1.size + b2.size + w3.size + b3.size) * 4),
    )

    out_t = pl.pallas_call(
        mlp_kernel,
        out_shape=jax.ShapeDtypeStruct((1, b_pad), jnp.float32),
        grid=(n_tiles,),
        in_specs=[
            # x: batch-tiled along lanes, double-buffered by BlockSpec pipelining.
            pl.BlockSpec((in_size, tile_b), lambda i: (0, i)),
            # Weights/biases: constant index_map -> DMA'd once, stay VMEM-resident.
            pl.BlockSpec((h1_dim, in_size), lambda i: (0, 0)),
            pl.BlockSpec((h1_dim, 1), lambda i: (0, 0)),
            pl.BlockSpec((h2_dim, h1_dim), lambda i: (0, 0)),
            pl.BlockSpec((h2_dim, 1), lambda i: (0, 0)),
            pl.BlockSpec((h2_dim, 1), lambda i: (0, 0)),
            # b3 is a single scalar: SMEM, no padded VMEM tile.
            pl.BlockSpec(memory_space=pltpu.MemorySpace.SMEM),
        ],
        out_specs=pl.BlockSpec((1, tile_b), lambda i: (0, i)),
        compiler_params=pltpu.CompilerParams(
            dimension_semantics=("parallel",),   # batch axis: megacore on v7x
            vmem_limit_bytes=int(vmem_limit),
        ),
        cost_estimate=cost,
    )(x_t, w1m, b1c, w2m, b2c, w3c, b3s)

    # Back to PyTorch (B, 1) convention; drop batch padding (padded columns
    # contain ReLU(b)-derived garbage and must never be consumed directly).
    return out_t[0, :B].reshape(B, 1)


def init_params(key, input_size):
    """torch.nn.Linear-style init (uniform +-1/sqrt(fan_in)), torch layout."""
    def linear(k, fan_in, fan_out):
        kw, kb = jax.random.split(k)
        bound = 1.0 / jnp.sqrt(jnp.float32(fan_in))
        w = jax.random.uniform(kw, (fan_out, fan_in), jnp.float32, -bound, bound)
        b = jax.random.uniform(kb, (fan_out,), jnp.float32, -bound, bound)
        return w, b

    k1, k2, k3 = jax.random.split(key, 3)
    w1, b1 = linear(k1, input_size, 64)
    w2, b2 = linear(k2, 64, 32)
    w3, b3 = linear(k3, 32, 1)
    return (w1, b1, w2, b2, w3, b3)


def reference_forward(x, params):
    w1, b1, w2, b2, w3, b3 = params
    h1 = jnp.maximum(x @ w1.T + b1, 0.0)
    h2 = jnp.maximum(h1 @ w2.T + b2, 0.0)
    return h2 @ w3.T + b3


if __name__ == "__main__":
    key = jax.random.PRNGKey(0)
    k_x, k_x2, k_p = jax.random.split(key, 3)

    input_size = 16
    params = init_params(k_p, input_size)

    # Small-batch case (single tile). Exact f32 path: tight tolerance.
    batch = 8
    x = jax.random.normal(k_x, (batch, input_size), dtype=jnp.float32)
    out_f32 = jax.block_until_ready(
        price_prediction_forward(x, params, use_bf16_inputs=False))
    ref = reference_forward(x, params)
    assert out_f32.shape == (batch, 1), out_f32.shape
    assert jnp.allclose(out_f32, ref, atol=1e-5, rtol=1e-5)

    # Default (bf16 MXU operands, f32 accumulation/epilogue) path.
    out_bf16 = jax.block_until_ready(price_prediction_forward(x, params))
    assert out_bf16.shape == (batch, 1)
    assert jnp.allclose(out_bf16, ref, atol=5e-2, rtol=5e-2)

    # Multi-tile case with a remainder (exercises grid pipelining + batch pad).
    batch2 = 300
    x2 = jax.random.normal(k_x2, (batch2, input_size), dtype=jnp.float32)
    ref2 = reference_forward(x2, params)
    out2 = jax.block_until_ready(
        price_prediction_forward(x2, params, tile_b=128, use_bf16_inputs=False))
    assert out2.shape == (batch2, 1), out2.shape
    assert jnp.allclose(out2, ref2, atol=1e-5, rtol=1e-5)

    # Default adaptive-tile bf16 path on the larger batch.
    out2_bf16 = jax.block_until_ready(price_prediction_forward(x2, params))
    assert out2_bf16.shape == (batch2, 1)
    assert jnp.allclose(out2_bf16, ref2, atol=5e-2, rtol=5e-2)

    # Caller-provided pre-transposed (input_size, B) layout: skips wrapper
    # transpose entirely.
    out2_t = jax.block_until_ready(
        price_prediction_forward(x2.T, params, use_bf16_inputs=False,
                                 x_transposed=True))
    assert jnp.allclose(out2_t, ref2, atol=1e-5, rtol=1e-5)

    print("KERNEL_OK")
</pallas_src>

<mosaic_0001>
module attributes {stable_mosaic.version = 11 : i64} {
  func.func @mlp_kernel(%arg0: i32, %arg1: memref<16x128xf32, #tpu.memory_space<vmem>>, %arg2: memref<64x16xf32, #tpu.memory_space<vmem>>, %arg3: memref<64x1xf32, #tpu.memory_space<vmem>>, %arg4: memref<32x64xf32, #tpu.memory_space<vmem>>, %arg5: memref<32x1xf32, #tpu.memory_space<vmem>>, %arg6: memref<32x1xf32, #tpu.memory_space<vmem>>, %arg7: memref<1x1xf32, #tpu.memory_space<smem>>, %arg8: memref<1x128xf32, #tpu.memory_space<vmem>>) attributes {dimension_semantics = [#tpu.dimension_semantics<parallel>], iteration_bounds = array<i64: 1>, scalar_prefetch = 0 : i64, scratch_operands = 0 : i64, tpu.core_type = #tpu.core_type<tc>, window_params = [{transform_indices = @transform_0, window_bounds = array<i64: 16, 128>}, {pipeline_mode = #tpu.pipeline_mode<synchronous>, transform_indices = @transform_1, window_bounds = array<i64: 64, 16>}, {pipeline_mode = #tpu.pipeline_mode<synchronous>, transform_indices = @transform_2, window_bounds = array<i64: 64, 1>}, {pipeline_mode = #tpu.pipeline_mode<synchronous>, transform_indices = @transform_3, window_bounds = array<i64: 32, 64>}, {pipeline_mode = #tpu.pipeline_mode<synchronous>, transform_indices = @transform_4, window_bounds = array<i64: 32, 1>}, {pipeline_mode = #tpu.pipeline_mode<synchronous>, transform_indices = @transform_5, window_bounds = array<i64: 32, 1>}, {transform_indices = @transform_6, window_bounds = array<i64: 1, 1>}, {transform_indices = @transform_7, window_bounds = array<i64: 1, 128>}]} {
    %c0 = arith.constant 0 : index
    %c0_0 = arith.constant 0 : index
    %0 = vector.load %arg2[%c0, %c0_0] : memref<64x16xf32, #tpu.memory_space<vmem>>, vector<64x16xf32>
    %c0_1 = arith.constant 0 : index
    %c0_2 = arith.constant 0 : index
    %1 = vector.load %arg1[%c0_1, %c0_2] : memref<16x128xf32, #tpu.memory_space<vmem>>, vector<16x128xf32>
    %cst = arith.constant dense<0.000000e+00> : vector<64x128xf32>
    %2 = tpu.matmul %0, %1, %cst {dimension_numbers = #tpu.dot_dimension_numbers<[1], [0], [0], [1], [0, 0, 1, 1], [], []>} : vector<64x16xf32>, vector<16x128xf32>, vector<64x128xf32> -> vector<64x128xf32>
    %c0_3 = arith.constant 0 : index
    %c0_4 = arith.constant 0 : index
    %3 = vector.load %arg3[%c0_3, %c0_4] : memref<64x1xf32, #tpu.memory_space<vmem>>, vector<64x1xf32>
    %4 = vector.broadcast %3 : vector<64x1xf32> to vector<64x128xf32>
    %5 = arith.addf %2, %4 : vector<64x128xf32>
    %cst_5 = arith.constant 0.000000e+00 : f32
    %6 = vector.broadcast %cst_5 : f32 to vector<64x128xf32>
    %7 = arith.maximumf %5, %6 : vector<64x128xf32>
    %c0_6 = arith.constant 0 : index
    %c0_7 = arith.constant 0 : index
    %8 = vector.load %arg4[%c0_6, %c0_7] : memref<32x64xf32, #tpu.memory_space<vmem>>, vector<32x64xf32>
    %cst_8 = arith.constant dense<0.000000e+00> : vector<32x128xf32>
    %9 = tpu.matmul %8, %7, %cst_8 {dimension_numbers = #tpu.dot_dimension_numbers<[1], [0], [0], [1], [0, 0, 1, 1], [], []>} : vector<32x64xf32>, vector<64x128xf32>, vector<32x128xf32> -> vector<32x128xf32>
    %c0_9 = arith.constant 0 : index
    %c0_10 = arith.constant 0 : index
    %10 = vector.load %arg5[%c0_9, %c0_10] : memref<32x1xf32, #tpu.memory_space<vmem>>, vector<32x1xf32>
    %11 = vector.broadcast %10 : vector<32x1xf32> to vector<32x128xf32>
    %12 = arith.addf %9, %11 : vector<32x128xf32>
    %cst_11 = arith.constant 0.000000e+00 : f32
    %13 = vector.broadcast %cst_11 : f32 to vector<32x128xf32>
    %14 = arith.maximumf %12, %13 : vector<32x128xf32>
    %c0_12 = arith.constant 0 : index
    %c0_13 = arith.constant 0 : index
    %15 = vector.load %arg6[%c0_12, %c0_13] : memref<32x1xf32, #tpu.memory_space<vmem>>, vector<32x1xf32>
    %16 = vector.broadcast %15 : vector<32x1xf32> to vector<32x128xf32>
    %17 = arith.mulf %14, %16 : vector<32x128xf32>
    %cst_14 = arith.constant dense<0.000000e+00> : vector<128xf32>
    %18 = vector.multi_reduction <add>, %17, %cst_14 [0] : vector<32x128xf32> to vector<128xf32>
    %19 = vector.shape_cast %18 : vector<128xf32> to vector<1x128xf32>
    %c0_15 = arith.constant 0 : index
    %c0_16 = arith.constant 0 : index
    %20 = memref.load %arg7[%c0_15, %c0_16] : memref<1x1xf32, #tpu.memory_space<smem>>
    %21 = vector.broadcast %20 : f32 to vector<1x128xf32>
    %22 = arith.addf %19, %21 : vector<1x128xf32>
    %c0_17 = arith.constant 0 : index
    %c0_18 = arith.constant 0 : index
    %23 = vector.load %arg8[%c0_17, %c0_18] : memref<1x128xf32, #tpu.memory_space<vmem>>, vector<1x128xf32>
    tpu.vector_store %arg8[%c0_17, %c0_18], %22 {strides = array<i32>} : memref<1x128xf32, #tpu.memory_space<vmem>>, vector<1x128xf32>,
    return
  }
  func.func @transform_0(%arg0: i32) -> (i32, i32) {
    %c0_i32 = arith.constant 0 : i32
    %c0_i32_0 = arith.constant 0 : i32
    return %c0_i32, %arg0 : i32, i32
  }
  func.func @transform_1(%arg0: i32) -> (i32, i32) {
    %c0_i32 = arith.constant 0 : i32
    %c0_i32_0 = arith.constant 0 : i32
    %c0_i32_1 = arith.constant 0 : i32
    return %c0_i32, %c0_i32_0 : i32, i32
  }
  func.func @transform_2(%arg0: i32) -> (i32, i32) {
    %c0_i32 = arith.constant 0 : i32
    %c0_i32_0 = arith.constant 0 : i32
    %c0_i32_1 = arith.constant 0 : i32
    return %c0_i32, %c0_i32_0 : i32, i32
  }
  func.func @transform_3(%arg0: i32) -> (i32, i32) {
    %c0_i32 = arith.constant 0 : i32
    %c0_i32_0 = arith.constant 0 : i32
    %c0_i32_1 = arith.constant 0 : i32
    return %c0_i32, %c0_i32_0 : i32, i32
  }
  func.func @transform_4(%arg0: i32) -> (i32, i32) {
    %c0_i32 = arith.constant 0 : i32
    %c0_i32_0 = arith.constant 0 : i32
    %c0_i32_1 = arith.constant 0 : i32
    return %c0_i32, %c0_i32_0 : i32, i32
  }
  func.func @transform_5(%arg0: i32) -> (i32, i32) {
    %c0_i32 = arith.constant 0 : i32
    %c0_i32_0 = arith.constant 0 : i32
    %c0_i32_1 = arith.constant 0 : i32
    return %c0_i32, %c0_i32_0 : i32, i32
  }
  func.func @transform_6(%arg0: i32) -> (i32, i32) {
    %c0_i32 = arith.constant 0 : i32
    %c0_i32_0 = arith.constant 0 : i32
    %c0_i32_1 = arith.constant 0 : i32
    return %c0_i32, %c0_i32_0 : i32, i32
  }
  func.func @transform_7(%arg0: i32) -> (i32, i32) {
    %c0_i32 = arith.constant 0 : i32
    %c0_i32_0 = arith.constant 0 : i32
    return %c0_i32, %arg0 : i32, i32
  }
}

</mosaic_0001>

<llo_original>
// kernel: tpu_custom_call.1
$region0: #{tpu_custom_call.1}
  #allocation0 [shape = 'u32[]', space=smem, size = 0x4, offset = 0x4, fixed_abs, tag = 'smem constant byte address 0x4 - core index']
  #allocation1 [shape = 'u32[144,128]{1,0:T(1,128)}', space=vmem, size = 0x12000, scoped, tag = 'internal scratch']
  #allocation2 [shape = 'f32[1,1]{1,0:T(1,128)S(6)}', space=smem, size = 0x200, scoped, tag = 'scoped memory for tpu_custom_call.1']
  %s0 = inlined_call_operand.vmem [shape: f32[16,128], index: 0, kind: input, shape index: {}]
  %s1 = inlined_call_operand.vmem [shape: f32[64,16], index: 1, kind: input, shape index: {}]
  %s2 = inlined_call_operand.vmem [shape: f32[64,1], index: 2, kind: input, shape index: {}]
  %s3 = inlined_call_operand.vmem [shape: f32[32,64], index: 3, kind: input, shape index: {}]
  %s4 = inlined_call_operand.vmem [shape: f32[32,1], index: 4, kind: input, shape index: {}]
  %s5 = inlined_call_operand.vmem [shape: f32[32,1], index: 5, kind: input, shape index: {}]
  %s6 = inlined_call_operand.<no memory space> [shape: f32[1,1], index: 6, kind: input, shape index: {}]
  %s7 = inlined_call_operand.hbm [shape: f32[1,128], index: 7, kind: output, shape index: {}]
  %s8 = sld [smem:[#allocation0]]
  $region38: #{tpu_custom_call.1} parent=0
    _
  %s10 = ssub.s32 1, %s8
  %s11 = scalar_select 0, %s10, %s8
  %12 = sst [smem:[#allocation2]] %s6
  $region1: #{tpu_custom_call.1} parent=0
    #allocation3 [shape = 'u8[512]{0}', space=vmem, size = 0x400, scoped, tag = 'output window, operand 0, single buffered']
    #allocation4 [shape = 's32[1]{0}', space=sflag, size = 0x4, scoped, tag = 'scoped memory for tpu_custom_call.1']
    %13 = vsyncpa [#allocation4], 0
    // Predicated region
    $region2: #{tpu_custom_call.1} parent=1 // pred_check
      _
    $region3: #{tpu_custom_call.1} parent=1 // pred_check_branch
      %15 = sbr.rel (0) target = $region5
    $region4: #{tpu_custom_call.1} parent=1 // pred_region
      _
    $region5: #{tpu_custom_call.1} parent=1 // pred_fallthru
      _
    // Predicated region
    $region6: #{tpu_custom_call.1} parent=1 // pred_check
      _
    $region7: #{tpu_custom_call.1} parent=1 // pred_check_branch
      %17 = sbr.rel (0) target = $region9
    $region8: #{tpu_custom_call.1} parent=1 // pred_region
      _
    $region9: #{tpu_custom_call.1} parent=1 // pred_fallthru
      _
    // Predicated region
    $region10: #{tpu_custom_call.1} parent=1 // pred_check
      _
    $region11: #{tpu_custom_call.1} parent=1 // pred_check_branch
      %19 = sbr.rel (0) target = $region13
    $region12: #{tpu_custom_call.1} parent=1 // pred_region
      _
    $region13: #{tpu_custom_call.1} parent=1 // pred_fallthru
      _
    // Predicated region
    $region14: #{tpu_custom_call.1} parent=1 // pred_check
      _
    $region15: #{tpu_custom_call.1} parent=1 // pred_check_branch
      %21 = sbr.rel (0) target = $region17
    $region16: #{tpu_custom_call.1} parent=1 // pred_region
      _
    $region17: #{tpu_custom_call.1} parent=1 // pred_fallthru
      _
    // Predicated region
    $region18: #{tpu_custom_call.1} parent=1 // pred_check
      _
    $region19: #{tpu_custom_call.1} parent=1 // pred_check_branch
      %23 = sbr.rel (0) target = $region21
    $region20: #{tpu_custom_call.1} parent=1 // pred_region
      _
    $region21: #{tpu_custom_call.1} parent=1 // pred_fallthru
      _
    // Predicated region
    $region22: #{tpu_custom_call.1} parent=1 // pred_check
      _
    $region23: #{tpu_custom_call.1} parent=1 // pred_check_branch
      %25 = sbr.rel (0) target = $region25
    $region24: #{tpu_custom_call.1} parent=1 // pred_region
      _
    $region25: #{tpu_custom_call.1} parent=1 // pred_fallthru
      _
    // Predicated region
    $region26: #{tpu_custom_call.1} parent=1 // pred_check
      _
    $region27: #{tpu_custom_call.1} parent=1 // pred_check_branch
      %27 = sbr.rel (0) target = $region29
    $region28: #{tpu_custom_call.1} parent=1 // pred_region
      _
    $region29: #{tpu_custom_call.1} parent=1 // pred_fallthru
      _
    %v28 = vld [vmem:[%s1] sm:$0xff]
    %v29 = vld [vmem:[%s1 + $0x8] sm:$0xff]
    %v30 = vld [vmem:[%s1 + $0x10] sm:$0xff]
    %v31 = vld [vmem:[%s1 + $0x18] sm:$0xff]
    %v32 = vld [vmem:[%s1 + $0x20] sm:$0xff]
    %v33 = vld [vmem:[%s1 + $0x28] sm:$0xff]
    %v34 = vld [vmem:[%s1 + $0x30] sm:$0xff]
    %v35 = vld [vmem:[%s1 + $0x38] sm:$0xff]
    %v36 = vld [vmem:[%s0] sm:$0xff]
    %v37 = vld [vmem:[%s0 + $0x8] sm:$0xff]
    %v38 = vld [vmem:[%s2] sm:$0xff]
    %v39 = vld [vmem:[%s2 + $0x8] sm:$0xff]
    %v40 = vld [vmem:[%s2 + $0x10] sm:$0xff]
    %v41 = vld [vmem:[%s2 + $0x18] sm:$0xff]
    %v42 = vld [vmem:[%s2 + $0x20] sm:$0xff]
    %v43 = vld [vmem:[%s2 + $0x28] sm:$0xff]
    %v44 = vld [vmem:[%s2 + $0x30] sm:$0xff]
    %v45 = vld [vmem:[%s2 + $0x38] sm:$0xff]
    %47 = vset.pattern.permute.xlu0 0
    %48 = vperm.xlu0 %47, %v38
    %v49 = vpop.permute.xlu0 %48
    %52 = vset.pattern.permute.xlu0 0
    %53 = vperm.xlu0 %52, %v39
    %v54 = vpop.permute.xlu0 %53
    %57 = vset.pattern.permute.xlu0 0
    %58 = vperm.xlu0 %57, %v40
    %v59 = vpop.permute.xlu0 %58
    %62 = vset.pattern.permute.xlu0 0
    %63 = vperm.xlu0 %62, %v41
    %v64 = vpop.permute.xlu0 %63
    %67 = vset.pattern.permute.xlu0 0
    %68 = vperm.xlu0 %67, %v42
    %v69 = vpop.permute.xlu0 %68
    %72 = vset.pattern.permute.xlu0 0
    %73 = vperm.xlu0 %72, %v43
    %v74 = vpop.permute.xlu0 %73
    %77 = vset.pattern.permute.xlu0 0
    %78 = vperm.xlu0 %77, %v44
    %v79 = vpop.permute.xlu0 %78
    %82 = vset.pattern.permute.xlu0 0
    %83 = vperm.xlu0 %82, %v45
    %v84 = vpop.permute.xlu0 %83
    %vm86 = vcmask 130048
    %v88 = vsel %vm86, %v28, 0
    %v91 = vsel %vm86, %v29, 0
    %v94 = vsel %vm86, %v30, 0
    %v97 = vsel %vm86, %v31, 0
    %v100 = vsel %vm86, %v32, 0
    %v103 = vsel %vm86, %v33, 0
    %v106 = vsel %vm86, %v34, 0
    %v109 = vsel %vm86, %v35, 0
    %111 = vmatprep.subr.mxu0 0.0
    %112 = vmatpush1.msra.mxu0 0.0
    %113 = vmatprep.subr.mxu0 0.0
    %114 = vmatpush1.msra.mxu0 0.0
    %115 = vmatprep.subr.mxu0 0.0
    %116 = vmatpush1.msra.mxu0 0.0
    %117 = vmatprep.subr.mxu0 0.0
    %118 = vmatpush1.msra.mxu0 0.0
    %119 = vmatprep.subr.mxu0 0.0
    %120 = vmatpush1.msra.mxu0 0.0
    %121 = vmatprep.subr.mxu0 0.0
    %122 = vmatpush1.msra.mxu0 0.0
    %123 = vmatprep.subr.mxu0 0.0
    %124 = vmatpush1.msra.mxu0 0.0
    %125 = vmatprep.subr.mxu0 0.0
    %126 = vmatpush1.msra.mxu0 0.0
    %127 = vmatprep.subr.mxu0 0.0
    %128 = vmatpush1.msra.mxu0 0.0
    %129 = vmatprep.subr.mxu0 0.0
    %130 = vmatpush1.msra.mxu0 0.0
    %131 = vmatprep.subr.mxu0 0.0
    %132 = vmatpush1.msra.mxu0 0.0
    %133 = vmatprep.subr.mxu0 0.0
    %134 = vmatpush1.msra.mxu0 0.0
    %135 = vmatprep.subr.mxu0 0.0
    %136 = vmatpush1.msra.mxu0 0.0
    %137 = vmatprep.subr.mxu0 0.0
    %138 = vmatpush1.msra.mxu0 0.0
    %139 = vmatprep.subr.mxu0 0.0
    %140 = vmatpush1.msra.mxu0 %v37
    %141 = vmatprep.subr.mxu0 0.0
    %142 = vmatpush1.msra.mxu0 %v36
    %143 = vmatprep.subr.mxu0 0.0
    %144 = vmatpush2.msra.mxu0 0.0
    %145 = vmatprep.subr.mxu0 0.0
    %146 = vmatpush2.msra.mxu0 0.0
    %147 = vmatprep.subr.mxu0 0.0
    %148 = vmatpush2.msra.mxu0 0.0
    %149 = vmatprep.subr.mxu0 0.0
    %150 = vmatpush2.msra.mxu0 0.0
    %151 = vmatprep.subr.mxu0 0.0
    %152 = vmatpush2.msra.mxu0 0.0
    %153 = vmatprep.subr.mxu0 0.0
    %154 = vmatpush2.msra.mxu0 0.0
    %155 = vmatprep.subr.mxu0 0.0
    %156 = vmatpush2.msra.mxu0 0.0
    %157 = vmatprep.subr.mxu0 0.0
    %158 = vmatpush2.msra.mxu0 0.0
    %159 = vmatprep.subr.mxu0 0.0
    %160 = vmatpush2.msra.mxu0 0.0
    %161 = vmatprep.subr.mxu0 0.0
    %162 = vmatpush2.msra.mxu0 0.0
    %163 = vmatprep.subr.mxu0 0.0
    %164 = vmatpush2.msra.mxu0 0.0
    %165 = vmatprep.subr.mxu0 0.0
    %166 = vmatpush2.msra.mxu0 0.0
    %167 = vmatprep.subr.mxu0 0.0
    %168 = vmatpush2.msra.mxu0 0.0
    %169 = vmatprep.subr.mxu0 0.0
    %170 = vmatpush2.msra.mxu0 0.0
    %171 = vmatprep.subr.mxu0 0.0
    %172 = vmatpush2.msra.mxu0 0.0
    %173 = vmatprep.subr.mxu0 0.0
    %174 = vmatpush2.msra.mxu0 0.0
    %175 = vmatprep.mubr.f32.mxu0 0.0
    %176 = vmatmul.mubr.f32.gmra.mxu0 %v88
    %v177 = vpop.f32.mrf.mxu0
    %v178 = vadd.f32 %v49, %v177
    %v179 = vpop.f32.mrf.mxu0
    %180 = vmatprep.mubr.f32.mxu0 0.0
    %181 = vmatmul.mubr.f32.gmra.mxu0 %v91
    %v182 = vpop.f32.mrf.mxu0
    %v183 = vadd.f32 %v54, %v182
    %v184 = vpop.f32.mrf.mxu0
    %185 = vmatprep.mubr.f32.mxu0 0.0
    %186 = vmatmul.mubr.f32.gmra.mxu0 %v94
    %v187 = vpop.f32.mrf.mxu0
    %v188 = vadd.f32 %v59, %v187
    %v189 = vpop.f32.mrf.mxu0
    %190 = vmatprep.mubr.f32.mxu0 0.0
    %191 = vmatmul.mubr.f32.gmra.mxu0 %v97
    %v192 = vpop.f32.mrf.mxu0
    %v193 = vadd.f32 %v64, %v192
    %v194 = vpop.f32.mrf.mxu0
    %195 = vmatprep.mubr.f32.mxu0 0.0
    %196 = vmatmul.mubr.f32.gmra.mxu0 %v100
    %v197 = vpop.f32.mrf.mxu0
    %v198 = vadd.f32 %v69, %v197
    %v199 = vpop.f32.mrf.mxu0
    %200 = vmatprep.mubr.f32.mxu0 0.0
    %201 = vmatmul.mubr.f32.gmra.mxu0 %v103
    %v202 = vpop.f32.mrf.mxu0
    %v203 = vadd.f32 %v74, %v202
    %v204 = vpop.f32.mrf.mxu0
    %205 = vmatprep.mubr.f32.mxu0 0.0
    %206 = vmatmul.mubr.f32.gmra.mxu0 %v106
    %v207 = vpop.f32.mrf.mxu0
    %v208 = vadd.f32 %v79, %v207
    %v209 = vpop.f32.mrf.mxu0
    %210 = vmatprep.mubr.f32.mxu0 0.0
    %211 = vmatmul.mubr.f32.gmra.mxu0 %v109
    %v212 = vpop.f32.mrf.mxu0
    %v213 = vadd.f32 %v84, %v212
    %v214 = vpop.f32.mrf.mxu0
    %215 = vdwg.mxu0
    %v216 = vmax.f32 %v178, 0.0
    %v217 = vmax.f32 %v183, 0.0
    %v218 = vmax.f32 %v188, 0.0
    %v219 = vmax.f32 %v193, 0.0
    %v220 = vmax.f32 %v198, 0.0
    %v221 = vmax.f32 %v203, 0.0
    %v222 = vmax.f32 %v208, 0.0
    %v223 = vmax.f32 %v213, 0.0
    %v224 = vld [vmem:[%s3] sm:$0xff]
    %v225 = vld [vmem:[%s3 + $0x8] sm:$0xff]
    %v226 = vld [vmem:[%s3 + $0x10] sm:$0xff]
    %v227 = vld [vmem:[%s3 + $0x18] sm:$0xff]
    %v228 = vld [vmem:[%s4] sm:$0xff]
    %v229 = vld [vmem:[%s4 + $0x8] sm:$0xff]
    %v230 = vld [vmem:[%s4 + $0x10] sm:$0xff]
    %v231 = vld [vmem:[%s4 + $0x18] sm:$0xff]
    %233 = vset.pattern.permute.xlu0 0
    %234 = vperm.xlu0 %233, %v228
    %v235 = vpop.permute.xlu0 %234
    %238 = vset.pattern.permute.xlu0 0
    %239 = vperm.xlu0 %238, %v229
    %v240 = vpop.permute.xlu0 %239
    %243 = vset.pattern.permute.xlu0 0
    %244 = vperm.xlu0 %243, %v230
    %v245 = vpop.permute.xlu0 %244
    %248 = vset.pattern.permute.xlu0 0
    %249 = vperm.xlu0 %248, %v231
    %v250 = vpop.permute.xlu0 %249
    %vm252 = vcmask 523264
    %v254 = vsel %vm252, %v224, 0
    %v257 = vsel %vm252, %v225, 0
    %v260 = vsel %vm252, %v226, 0
    %v263 = vsel %vm252, %v227, 0
    %265 = vmatprep.subr.mxu0 0.0
    %266 = vmatpush1.msra.mxu0 0.0
    %267 = vmatprep.subr.mxu0 0.0
    %268 = vmatpush1.msra.mxu0 0.0
    %269 = vmatprep.subr.mxu0 0.0
    %270 = vmatpush1.msra.mxu0 0.0
    %271 = vmatprep.subr.mxu0 0.0
    %272 = vmatpush1.msra.mxu0 0.0
    %273 = vmatprep.subr.mxu0 0.0
    %274 = vmatpush1.msra.mxu0 0.0
    %275 = vmatprep.subr.mxu0 0.0
    %276 = vmatpush1.msra.mxu0 0.0
    %277 = vmatprep.subr.mxu0 0.0
    %278 = vmatpush1.msra.mxu0 0.0
    %279 = vmatprep.subr.mxu0 0.0
    %280 = vmatpush1.msra.mxu0 0.0
    %281 = vmatprep.subr.mxu0 0.0
    %282 = vmatpush1.msra.mxu0 %v223
    %283 = vmatprep.subr.mxu0 0.0
    %284 = vmatpush1.msra.mxu0 %v222
    %285 = vmatprep.subr.mxu0 0.0
    %286 = vmatpush1.msra.mxu0 %v221
    %287 = vmatprep.subr.mxu0 0.0
    %288 = vmatpush1.msra.mxu0 %v220
    %289 = vmatprep.subr.mxu0 0.0
    %290 = vmatpush1.msra.mxu0 %v219
    %291 = vmatprep.subr.mxu0 0.0
    %292 = vmatpush1.msra.mxu0 %v218
    %293 = vmatprep.subr.mxu0 0.0
    %294 = vmatpush1.msra.mxu0 %v217
    %295 = vmatprep.subr.mxu0 0.0
    %296 = vmatpush1.msra.mxu0 %v216
    %297 = vmatprep.subr.mxu0 0.0
    %298 = vmatpush2.msra.mxu0 0.0
    %299 = vmatprep.subr.mxu0 0.0
    %300 = vmatpush2.msra.mxu0 0.0
    %301 = vmatprep.subr.mxu0 0.0
    %302 = vmatpush2.msra.mxu0 0.0
    %303 = vmatprep.subr.mxu0 0.0
    %304 = vmatpush2.msra.mxu0 0.0
    %305 = vmatprep.subr.mxu0 0.0
    %306 = vmatpush2.msra.mxu0 0.0
    %307 = vmatprep.subr.mxu0 0.0
    %308 = vmatpush2.msra.mxu0 0.0
    %309 = vmatprep.subr.mxu0 0.0
    %310 = vmatpush2.msra.mxu0 0.0
    %311 = vmatprep.subr.mxu0 0.0
    %312 = vmatpush2.msra.mxu0 0.0
    %313 = vmatprep.subr.mxu0 0.0
    %314 = vmatpush2.msra.mxu0 0.0
    %315 = vmatprep.subr.mxu0 0.0
    %316 = vmatpush2.msra.mxu0 0.0
    %317 = vmatprep.subr.mxu0 0.0
    %318 = vmatpush2.msra.mxu0 0.0
    %319 = vmatprep.subr.mxu0 0.0
    %320 = vmatpush2.msra.mxu0 0.0
    %321 = vmatprep.subr.mxu0 0.0
    %322 = vmatpush2.msra.mxu0 0.0
    %323 = vmatprep.subr.mxu0 0.0
    %324 = vmatpush2.msra.mxu0 0.0
    %325 = vmatprep.subr.mxu0 0.0
    %326 = vmatpush2.msra.mxu0 0.0
    %327 = vmatprep.subr.mxu0 0.0
    %328 = vmatpush2.msra.mxu0 0.0
    %329 = vmatprep.mubr.f32.mxu0 0.0
    %330 = vmatmul.mubr.f32.gmra.mxu0 %v254
    %v331 = vpop.f32.mrf.mxu0
    %v332 = vadd.f32 %v235, %v331
    %v333 = vpop.f32.mrf.mxu0
    %334 = vmatprep.mubr.f32.mxu0 0.0
    %335 = vmatmul.mubr.f32.gmra.mxu0 %v257
    %v336 = vpop.f32.mrf.mxu0
    %v337 = vadd.f32 %v240, %v336
    %v338 = vpop.f32.mrf.mxu0
    %339 = vmatprep.mubr.f32.mxu0 0.0
    %340 = vmatmul.mubr.f32.gmra.mxu0 %v260
    %v341 = vpop.f32.mrf.mxu0
    %v342 = vadd.f32 %v245, %v341
    %v343 = vpop.f32.mrf.mxu0
    %344 = vmatprep.mubr.f32.mxu0 0.0
    %345 = vmatmul.mubr.f32.gmra.mxu0 %v263
    %v346 = vpop.f32.mrf.mxu0
    %v347 = vadd.f32 %v250, %v346
    %v348 = vpop.f32.mrf.mxu0
    %349 = vdwg.mxu0
    %v350 = vmax.f32 %v332, 0.0
    %v351 = vmax.f32 %v337, 0.0
    %v352 = vmax.f32 %v342, 0.0
    %v353 = vmax.f32 %v347, 0.0
    %v354 = vld [vmem:[%s5] sm:$0xff]
    %v355 = vld [vmem:[%s5 + $0x8] sm:$0xff]
    %v356 = vld [vmem:[%s5 + $0x10] sm:$0xff]
    %v357 = vld [vmem:[%s5 + $0x18] sm:$0xff]
    %359 = vset.pattern.permute.xlu0 0
    %360 = vperm.xlu0 %359, %v354
    %v361 = vpop.permute.xlu0 %360
    %364 = vset.pattern.permute.xlu0 0
    %365 = vperm.xlu0 %364, %v355
    %v366 = vpop.permute.xlu0 %365
    %369 = vset.pattern.permute.xlu0 0
    %370 = vperm.xlu0 %369, %v356
    %v371 = vpop.permute.xlu0 %370
    %374 = vset.pattern.permute.xlu0 0
    %375 = vperm.xlu0 %374, %v357
    %v376 = vpop.permute.xlu0 %375
    %v378 = vmul.f32 %v350, %v361
    %v379 = vmul.f32 %v351, %v366
    %v380 = vmul.f32 %v352, %v371
    %v381 = vmul.f32 %v353, %v376
    %v382 = vadd.f32 %v378, %v379
    %v383 = vadd.f32 %v382, %v380
    %v384 = vadd.f32 %v383, %v381
    %v385 = vrot.slane %v384, 4
    %v386 = vadd.f32 %v384, %v385
    %v387 = vrot.slane %v386, 2
    %v388 = vadd.f32 %v386, %v387
    %v389 = vrot.slane %v388, 1
    %v390 = vadd.f32 %v388, %v389
    %s391 = sld [smem:[#allocation2]]
    %v392 = vstv %s391
    %v393 = vadd.f32 %v390, %v392
    %394 = vst [vmem:[#allocation3] sm:$0x1] %v393
    // Predicated region
    $region30: #{tpu_custom_call.1} parent=1 // pred_check
      _
    $region31: #{tpu_custom_call.1} parent=1 // pred_check_branch
      %396 = sbr.rel (0) target = $region33
    $region32: #{tpu_custom_call.1} parent=1 // pred_region
      %s398 = ssub.s32 16, 16
      %399 = vsyncadd [#allocation4], %s398
      %s401 = sshll.u32 [#allocation3], 4
      %s402 = int_to_ptr.vmem [resolvable:$true] %s401
      %404 = dma.vmem_to_hbm [thread:$0]  %s402, 16, %s7, [#allocation4]
    $region33: #{tpu_custom_call.1} parent=1 // pred_fallthru
      _
    // Predicated region
    $region34: #{tpu_custom_call.1} parent=1 // pred_check
      _
    $region35: #{tpu_custom_call.1} parent=1 // pred_check_branch
      %406 = sbr.rel (0) target = $region37
    $region36: #{tpu_custom_call.1} parent=1 // pred_region
      %407 = dma.done [#allocation4], 16
    $region37: #{tpu_custom_call.1} parent=1 // pred_fallthru
      _
    %408 = vsyncpa [#allocation4], 1

</llo_original>
